<compile_context>
chip_gen: v7x
topology: tpu7x:2x2x1
jax: 0.10.0
libtpu: 0.0.40
codegen_flags: <defaults>
</compile_context>

<pallas_src>
import functools

import jax
import jax.numpy as jnp
from jax import lax
from jax.experimental import pallas as pl
from jax.experimental.pallas import tpu as pltpu


def _wce_kernel(pred_ref, target_ref, weight_ref, out_ref, *, num_classes):
    # pred_ref   : (C, R, 128)   logits for this spatial tile
    # target_ref : (1, R, 128)   int class ids
    # weight_ref : (1, R, 128)   per-pixel weights
    # out_ref    : (1, 1, 128)   lane-parallel partial sum for this tile
    logits = jnp.clip(pred_ref[...].astype(jnp.float32), -50.0, 50.0)   # (C, R, 128)

    # Numerically-stable log-softmax pieces over the class axis (axis 0).
    # axis-0 reductions are elementwise across vreg slabs -> VPU only.
    m = jnp.max(logits, axis=0, keepdims=True)                          # (1, R, 128)
    shifted = logits - m                                                # (C, R, 128)
    lse = jnp.log(jnp.sum(jnp.exp(shifted), axis=0))                    # (R, 128)

    # One-hot gather of the *shifted* logit at the target class
    # (log_probs = shifted - lse is never materialized as a (C,R,128) temp).
    tgt = jnp.clip(target_ref[0], 0, num_classes - 1)                   # (R, 128) int32
    class_ids = lax.broadcasted_iota(jnp.int32, logits.shape, 0)        # (C, R, 128)
    onehot = (class_ids == tgt[None, :, :]).astype(jnp.float32)         # (C, R, 128)
    gathered = jnp.sum(shifted * onehot, axis=0)                        # (R, 128)
    selected = gathered - lse                                           # (R, 128)

    wl = -weight_ref[0].astype(jnp.float32) * selected                  # (R, 128)
    # Single cross-sublane reduce per tile (amortized over the whole block).
    out_ref[...] = jnp.sum(wl, axis=0, keepdims=True)[None]             # (1, 1, 128)


def _choose_row_tile(rows, num_classes, *, pred_buf_bytes=8 << 20, max_rows=1024):
    """Pick the row tile (each row = 128 pixels).

    row_tile must be a multiple of 8 that divides `rows`, or `rows` itself
    (full extent), to satisfy the (8, 128) block-tiling rule.  It is capped so
    one double-buffered pred tile stays within a per-generation-safe VMEM
    budget (well under the 32 MiB scoped default, incl. v7x's 64 MiB VMEM).
    """
    cap = max(8, min(max_rows, pred_buf_bytes // (num_classes * 128 * 4)))
    if rows <= cap:
        return rows
    best = None
    r = 8
    while r <= cap:
        if rows % r == 0:
            best = r
        r += 8
    return best if best is not None else rows


def weighted_cross_entropy_loss(pred_nchw, target_bhw, weight_bhw, *, row_tile=None):
    """pred_nchw: (B, C, H, W) float; target_bhw: (B, H, W) int;
    weight_bhw: (B, H, W) float.  Returns scalar mean weighted CE loss."""
    B, C, H, W = pred_nchw.shape
    S = H * W
    assert S % 128 == 0, "H*W must be a multiple of 128 (pad spatially otherwise)"
    rows = S // 128
    if row_tile is None:
        row_tile = _choose_row_tile(rows, C)
    assert rows % row_tile == 0, "row_tile must divide H*W/128"
    num_tiles = rows // row_tile

    # Free, contiguous reshapes: pixels land lane-dense on the 128-lane axis.
    pred = pred_nchw.reshape(B * C, rows, 128)
    target = target_bhw.reshape(B, rows, 128).astype(jnp.int32)
    weight = weight_bhw.reshape(B, rows, 128).astype(jnp.float32)

    kernel = functools.partial(_wce_kernel, num_classes=C)

    partials = pl.pallas_call(
        kernel,
        out_shape=jax.ShapeDtypeStruct((B * num_tiles, 1, 128), jnp.float32),
        grid_spec=pltpu.PrefetchScalarGridSpec(
            num_scalar_prefetch=0,
            grid=(B, num_tiles),
            in_specs=[
                pl.BlockSpec((C, row_tile, 128), lambda b, t: (b, t, 0)),
                pl.BlockSpec((1, row_tile, 128), lambda b, t: (b, t, 0)),
                pl.BlockSpec((1, row_tile, 128), lambda b, t: (b, t, 0)),
            ],
            # Each grid cell owns its own lane-dense (1, 128) partial block.
            out_specs=pl.BlockSpec((1, 1, 128),
                                   lambda b, t: (b * num_tiles + t, 0, 0)),
        ),
        compiler_params=pltpu.CompilerParams(
            dimension_semantics=("parallel", "parallel"),
        ),
    )(pred, target, weight)

    # Tiny epilogue reduction outside the kernel (negligible vs. input traffic).
    return jnp.sum(partials) / (B * S)


def _reference(pred, target, weight):
    B, C, H, W = pred.shape
    p = jnp.clip(pred, -50.0, 50.0)
    t = jnp.clip(target, 0, C - 1)
    log_probs = jax.nn.log_softmax(p, axis=1)
    sel = jnp.take_along_axis(log_probs, t[:, None, :, :], axis=1)[:, 0]
    return jnp.mean(-weight * sel)


if __name__ == "__main__":
    key = jax.random.PRNGKey(0)
    k1, k2, k3 = jax.random.split(key, 3)

    B, C, H, W = 2, 4, 16, 16
    pred = jax.random.normal(k1, (B, C, H, W), dtype=jnp.float32) * 3.0
    target = jax.random.randint(k2, (B, H, W), 0, C, dtype=jnp.int32)
    # Deterministic synthetic weight map (stands in for the precomputed .npy maps).
    weight = 1.0 + jax.random.uniform(k3, (B, H, W), dtype=jnp.float32)

    loss = weighted_cross_entropy_loss(pred, target, weight)
    loss = jax.block_until_ready(loss)

    ref = _reference(pred, target, weight)
    assert jnp.allclose(loss, ref, rtol=1e-5, atol=1e-5), (loss, ref)

    print("KERNEL_OK")
</pallas_src>

<mosaic_0001>
module attributes {stable_mosaic.version = 11 : i64} {
  func.func @_wce_kernel(%arg0: i32, %arg1: i32, %arg2: memref<4x2x128xf32, #tpu.memory_space<vmem>>, %arg3: memref<1x2x128xi32, #tpu.memory_space<vmem>>, %arg4: memref<1x2x128xf32, #tpu.memory_space<vmem>>, %arg5: memref<1x1x128xf32, #tpu.memory_space<vmem>>) attributes {dimension_semantics = [#tpu.dimension_semantics<parallel>, #tpu.dimension_semantics<parallel>], iteration_bounds = array<i64: 2, 1>, scalar_prefetch = 0 : i64, scratch_operands = 0 : i64, tpu.core_type = #tpu.core_type<tc>, window_params = [{transform_indices = @transform_0, window_bounds = array<i64: 4, 2, 128>}, {transform_indices = @transform_1, window_bounds = array<i64: 1, 2, 128>}, {transform_indices = @transform_2, window_bounds = array<i64: 1, 2, 128>}, {transform_indices = @transform_3, window_bounds = array<i64: 1, 1, 128>}]} {
    %c0 = arith.constant 0 : index
    %c0_0 = arith.constant 0 : index
    %c0_1 = arith.constant 0 : index
    %0 = vector.load %arg2[%c0, %c0_0, %c0_1] : memref<4x2x128xf32, #tpu.memory_space<vmem>>, vector<4x2x128xf32>
    %cst = arith.constant -5.000000e+01 : f32
    %cst_2 = arith.constant 5.000000e+01 : f32
    %1 = vector.broadcast %cst : f32 to vector<4x2x128xf32>
    %2 = arith.maximumf %1, %0 : vector<4x2x128xf32>
    %3 = vector.broadcast %cst_2 : f32 to vector<4x2x128xf32>
    %4 = arith.minimumf %3, %2 : vector<4x2x128xf32>
    %cst_3 = arith.constant dense<0xFF800000> : vector<2x128xf32>
    %5 = vector.multi_reduction <maximumf>, %4, %cst_3 [0] : vector<4x2x128xf32> to vector<2x128xf32>
    %6 = vector.shape_cast %5 : vector<2x128xf32> to vector<1x2x128xf32>
    %7 = vector.broadcast %6 : vector<1x2x128xf32> to vector<4x2x128xf32>
    %8 = arith.subf %4, %7 : vector<4x2x128xf32>
    %9 = math.exp %8 : vector<4x2x128xf32>
    %cst_4 = arith.constant dense<0.000000e+00> : vector<2x128xf32>
    %10 = vector.multi_reduction <add>, %9, %cst_4 [0] : vector<4x2x128xf32> to vector<2x128xf32>
    %11 = math.log %10 : vector<2x128xf32>
    %c0_5 = arith.constant 0 : index
    %c0_6 = arith.constant 0 : index
    %c0_7 = arith.constant 0 : index
    %12 = vector.load %arg3[%c0_5, %c0_6, %c0_7] : memref<1x2x128xi32, #tpu.memory_space<vmem>>, vector<1x2x128xi32>
    %13 = vector.shape_cast %12 : vector<1x2x128xi32> to vector<2x128xi32>
    %c0_i32 = arith.constant 0 : i32
    %c3_i32 = arith.constant 3 : i32
    %14 = vector.broadcast %c0_i32 : i32 to vector<2x128xi32>
    %15 = arith.maxsi %14, %13 : vector<2x128xi32>
    %16 = vector.broadcast %c3_i32 : i32 to vector<2x128xi32>
    %17 = arith.minsi %16, %15 : vector<2x128xi32>
    %18 = tpu.iota {dimensions = array<i32: 0>} : vector<4x2x128xi32>
    %19 = vector.shape_cast %17 : vector<2x128xi32> to vector<1x2x128xi32>
    %20 = vector.broadcast %19 : vector<1x2x128xi32> to vector<4x2x128xi32>
    %21 = arith.cmpi eq, %18, %20 : vector<4x2x128xi32>
    %22 = arith.extui %21 : vector<4x2x128xi1> to vector<4x2x128xi32>
    %23 = arith.sitofp %22 : vector<4x2x128xi32> to vector<4x2x128xf32>
    %24 = arith.mulf %8, %23 : vector<4x2x128xf32>
    %cst_8 = arith.constant dense<0.000000e+00> : vector<2x128xf32>
    %25 = vector.multi_reduction <add>, %24, %cst_8 [0] : vector<4x2x128xf32> to vector<2x128xf32>
    %26 = arith.subf %25, %11 : vector<2x128xf32>
    %c0_9 = arith.constant 0 : index
    %c0_10 = arith.constant 0 : index
    %c0_11 = arith.constant 0 : index
    %27 = vector.load %arg4[%c0_9, %c0_10, %c0_11] : memref<1x2x128xf32, #tpu.memory_space<vmem>>, vector<1x2x128xf32>
    %28 = vector.shape_cast %27 : vector<1x2x128xf32> to vector<2x128xf32>
    %cst_12 = arith.constant 0.000000e+00 : f32
    %29 = vector.broadcast %cst_12 : f32 to vector<2x128xf32>
    %30 = arith.subf %29, %28 : vector<2x128xf32>
    %31 = arith.mulf %30, %26 : vector<2x128xf32>
    %cst_13 = arith.constant dense<0.000000e+00> : vector<128xf32>
    %32 = vector.multi_reduction <add>, %31, %cst_13 [0] : vector<2x128xf32> to vector<128xf32>
    %33 = vector.shape_cast %32 : vector<128xf32> to vector<1x128xf32>
    %34 = vector.shape_cast %33 : vector<1x128xf32> to vector<1x1x128xf32>
    %c0_14 = arith.constant 0 : index
    %c0_15 = arith.constant 0 : index
    %c0_16 = arith.constant 0 : index
    %35 = vector.load %arg5[%c0_14, %c0_15, %c0_16] : memref<1x1x128xf32, #tpu.memory_space<vmem>>, vector<1x1x128xf32>
    tpu.vector_store %arg5[%c0_14, %c0_15, %c0_16], %34 {strides = array<i32>} : memref<1x1x128xf32, #tpu.memory_space<vmem>>, vector<1x1x128xf32>,
    return
  }
  func.func @transform_0(%arg0: i32, %arg1: i32) -> (i32, i32, i32) {
    %c0_i32 = arith.constant 0 : i32
    %c0_i32_0 = arith.constant 0 : i32
    return %arg0, %arg1, %c0_i32 : i32, i32, i32
  }
  func.func @transform_1(%arg0: i32, %arg1: i32) -> (i32, i32, i32) {
    %c0_i32 = arith.constant 0 : i32
    %c0_i32_0 = arith.constant 0 : i32
    return %arg0, %arg1, %c0_i32 : i32, i32, i32
  }
  func.func @transform_2(%arg0: i32, %arg1: i32) -> (i32, i32, i32) {
    %c0_i32 = arith.constant 0 : i32
    %c0_i32_0 = arith.constant 0 : i32
    return %arg0, %arg1, %c0_i32 : i32, i32, i32
  }
  func.func @transform_3(%arg0: i32, %arg1: i32) -> (i32, i32, i32) {
    %c1_i32 = arith.constant 1 : i32
    %0 = arith.muli %arg0, %c1_i32 : i32
    %1 = arith.addi %0, %arg1 : i32
    %c0_i32 = arith.constant 0 : i32
    %c0_i32_0 = arith.constant 0 : i32
    %c0_i32_1 = arith.constant 0 : i32
    return %1, %c0_i32, %c0_i32_0 : i32, i32, i32
  }
}

</mosaic_0001>

<llo_original>
// kernel: tpu_custom_call.1
$region0: #{tpu_custom_call.1}
  #allocation0 [shape = 'u32[]', space=smem, size = 0x4, offset = 0x4, fixed_abs, tag = 'smem constant byte address 0x4 - core index']
  #allocation1 [shape = 'u32[144,128]{1,0:T(1,128)}', space=vmem, size = 0x12000, scoped, tag = 'internal scratch']
  %s0 = inlined_call_operand.hbm [shape: f32[8,2,128], index: 0, kind: input, shape index: {}]
  %s1 = inlined_call_operand.hbm [shape: s32[2,2,128], index: 1, kind: input, shape index: {}]
  %s2 = inlined_call_operand.vmem [shape: f32[2,2,128], index: 2, kind: input, shape index: {}]
  %s3 = inlined_call_operand.hbm [shape: f32[2,1,128], index: 3, kind: output, shape index: {}]
  %s4 = sld [smem:[#allocation0]]
  $region53: #{tpu_custom_call.1} parent=0
    _
  %s6 = ssub.s32 1, %s4
  %s7 = scalar_select 0, %s6, %s4
  $region1: #{tpu_custom_call.1} parent=0
    #allocation2 [shape = 'u8[8192]{0}', space=vmem, size = 0x2000, scoped, tag = 'input window, operand 0']
    #allocation3 [shape = 's32[2]{0}', space=sflag, size = 0x8, scoped, tag = 'scoped memory for tpu_custom_call.1']
    #allocation4 [shape = 's32[2]{0}', space=sflag, size = 0x8, scoped, tag = 'scoped memory for tpu_custom_call.1']
    #allocation5 [shape = 'u8[2048]{0}', space=vmem, size = 0x800, scoped, tag = 'input window, operand 1']
    #allocation6 [shape = 's32[2]{0}', space=sflag, size = 0x8, scoped, tag = 'scoped memory for tpu_custom_call.1']
    #allocation7 [shape = 'u8[1024]{0}', space=vmem, size = 0x400, scoped, tag = 'output window, operand 0']
    %8 = vsyncpa [#allocation3], 0
    %s9 = scalar_lea.sflag [#allocation3], 1
    %10 = vsyncpa %s9, 0
    %11 = vsyncpa [#allocation6], 0
    %s12 = scalar_lea.sflag [#allocation6], 1
    %13 = vsyncpa %s12, 0
    %14 = vsyncpa [#allocation4], 0
    %s15 = scalar_lea.sflag [#allocation4], 1
    %16 = vsyncpa %s15, 0
    loop: start=0, step=1, limit=4
    $region2: #{tpu_custom_call.1} parent=1 // loop_pre_header
      _
    $region3: #{tpu_custom_call.1} parent=1 // loop_header
      %s18 = sphi 0, %s22
      %p19 = scmp.ge.s32.totalorder %s18, 4
      %s25 = sphi 0, %s37
      %s26 = sphi 0, %s33
      %s27 = sphi 0, %s25
      %s28 = sphi 0, %s26
      %s29 = sphi 0, %s27
      %s30 = sphi 0, %s28
      %s42 = sphi 0, %s44
      %s45 = sphi 0, %s42
      %s46 = sphi 0, %s45
      %s62 = sphi 0, %s46
      %s70 = sphi 0, %s72
      %s73 = sphi 0, %s70
      %s74 = sphi 0, %s73
      %s90 = sphi 0, %s74
      %s98 = sphi 0, %s100
      %s101 = sphi 0, %s98
      %s102 = sphi 0, %s101
      %s118 = sphi 0, %s102
      %s126 = sphi 0, %s128
      %s129 = sphi 0, %s126
      %s130 = sphi 0, %s129
      %s146 = sphi 0, %s130
    $region4: #{tpu_custom_call.1} parent=1 // loop_header_branch
      %21 = sbr.rel (%p19) target = $region8
    $region5: #{tpu_custom_call.1} parent=1 // loop_body
      %s23 = ssub.s32 %s18, 1
      %s24 = ssub.s32 %s18, 2
      %s31 = sadd.s32 1, %s26
      %p32 = scmp.ge.s32.totalorder %s31, 1
      %s33 = scalar_select %p32, 0, %s31
      %s34 = sadd.s32 1, %s25
      %s35 = scalar_select %p32, %s34, %s25
      %p36 = scmp.ge.s32.totalorder %s35, 2
      %s37 = scalar_select %p36, 0, %s35
      %s38 = ssub.s32 %s25, %s37
      %s39 = ssub.s32 %s26, %s33
      %s40 = sor.u32 %s38, %s39
      %p41 = scmp.eq.s32.totalorder %s40, 0
      %s43 = sadd.s32 %s42, 1
      %s44 = scalar_select %p41, %s42, %s43
      %p47 = pneg %p41
      %p48 = scmp.eq.s32.totalorder %s18, 1
      %p49 = por %p47, %p48
      %p50 = scmp.ne.s32.totalorder %s42, %s45
      %p51 = scmp.eq.s32.totalorder %s18, 0
      %p52 = por %p50, %p51
      %p53 = scmp.ne.s32.totalorder %s42, %s45
      %p54 = scmp.eq.s32.totalorder %s23, 1
      %p55 = por %p53, %p54
      %p56 = scmp.ne.s32.totalorder %s45, %s46
      %p57 = scmp.eq.s32.totalorder %s23, 0
      %p58 = por %p56, %p57
      %p59 = scmp.ne.s32.totalorder %s45, %s46
      %p60 = scmp.eq.s32.totalorder %s24, 1
      %p61 = por %p59, %p60
      %p63 = scmp.ne.s32.totalorder %s46, %s62
      %p64 = scmp.eq.s32.totalorder %s24, 0
      %p65 = por %p63, %p64
      %s66 = ssub.s32 %s25, %s37
      %s67 = ssub.s32 %s26, %s33
      %s68 = sor.u32 %s66, %s67
      %p69 = scmp.eq.s32.totalorder %s68, 0
      %s71 = sadd.s32 %s70, 1
      %s72 = scalar_select %p69, %s70, %s71
      %p75 = pneg %p69
      %p76 = scmp.eq.s32.totalorder %s18, 1
      %p77 = por %p75, %p76
      %p78 = scmp.ne.s32.totalorder %s70, %s73
      %p79 = scmp.eq.s32.totalorder %s18, 0
      %p80 = por %p78, %p79
      %p81 = scmp.ne.s32.totalorder %s70, %s73
      %p82 = scmp.eq.s32.totalorder %s23, 1
      %p83 = por %p81, %p82
      %p84 = scmp.ne.s32.totalorder %s73, %s74
      %p85 = scmp.eq.s32.totalorder %s23, 0
      %p86 = por %p84, %p85
      %p87 = scmp.ne.s32.totalorder %s73, %s74
      %p88 = scmp.eq.s32.totalorder %s24, 1
      %p89 = por %p87, %p88
      %p91 = scmp.ne.s32.totalorder %s74, %s90
      %p92 = scmp.eq.s32.totalorder %s24, 0
      %p93 = por %p91, %p92
      %s94 = ssub.s32 %s25, %s37
      %s95 = ssub.s32 %s26, %s33
      %s96 = sor.u32 %s94, %s95
      %p97 = scmp.eq.s32.totalorder %s96, 0
      %s99 = sadd.s32 %s98, 1
      %s100 = scalar_select %p97, %s98, %s99
      %p103 = pneg %p97
      %p104 = scmp.eq.s32.totalorder %s18, 1
      %p105 = por %p103, %p104
      %p106 = scmp.ne.s32.totalorder %s98, %s101
      %p107 = scmp.eq.s32.totalorder %s18, 0
      %p108 = por %p106, %p107
      %p109 = scmp.ne.s32.totalorder %s98, %s101
      %p110 = scmp.eq.s32.totalorder %s23, 1
      %p111 = por %p109, %p110
      %p112 = scmp.ne.s32.totalorder %s101, %s102
      %p113 = scmp.eq.s32.totalorder %s23, 0
      %p114 = por %p112, %p113
      %p115 = scmp.ne.s32.totalorder %s101, %s102
      %p116 = scmp.eq.s32.totalorder %s24, 1
      %p117 = por %p115, %p116
      %p119 = scmp.ne.s32.totalorder %s102, %s118
      %p120 = scmp.eq.s32.totalorder %s24, 0
      %p121 = por %p119, %p120
      %s122 = sadd.s32 %s25, %s26
      %s123 = sadd.s32 %s37, %s33
      %s124 = ssub.s32 %s122, %s123
      %p125 = scmp.eq.s32.totalorder %s124, 0
      %s127 = sadd.s32 %s126, 1
      %s128 = scalar_select %p125, %s126, %s127
      %p131 = pneg %p125
      %p132 = scmp.eq.s32.totalorder %s18, 1
      %p133 = por %p131, %p132
      %p134 = scmp.ne.s32.totalorder %s126, %s129
      %p135 = scmp.eq.s32.totalorder %s18, 0
      %p136 = por %p134, %p135
      %p137 = scmp.ne.s32.totalorder %s126, %s129
      %p138 = scmp.eq.s32.totalorder %s23, 1
      %p139 = por %p137, %p138
      %p140 = scmp.ne.s32.totalorder %s129, %s130
      %p141 = scmp.eq.s32.totalorder %s23, 0
      %p142 = por %p140, %p141
      %p143 = scmp.ne.s32.totalorder %s129, %s130
      %p144 = scmp.eq.s32.totalorder %s24, 1
      %p145 = por %p143, %p144
      %p147 = scmp.ne.s32.totalorder %s130, %s146
      %p148 = scmp.eq.s32.totalorder %s24, 0
      %p149 = por %p147, %p148
      %p150 = scmp.le.s32.totalorder 1, %s18
      %p151 = scmp.lt.s32.totalorder %s18, 3
      %p152 = pnand %p150, %p151
      %p153 = pneg %p152
      // Predicated region
      $region9: #{tpu_custom_call.1} parent=5 // pred_check
        _
      $region10: #{tpu_custom_call.1} parent=5 // pred_check_branch
        %155 = sbr.rel (%p152) target = $region12
      $region11: #{tpu_custom_call.1} parent=5 // pred_region
        %s156 = ssub.s32 %s18, 1
      $region12: #{tpu_custom_call.1} parent=5 // pred_fallthru
        _
      %p157 = scmp.lt.s32.totalorder %s18, 2
      // Predicated region
      $region13: #{tpu_custom_call.1} parent=5 // pred_check
        %p158 = pneg %p157
      $region14: #{tpu_custom_call.1} parent=5 // pred_check_branch
        %160 = sbr.rel (%p158) target = $region16
      $region15: #{tpu_custom_call.1} parent=5 // pred_region
        // Predicated region
        $region17: #{tpu_custom_call.1} parent=15 // pred_check
          %p161 = pneg %p52
        $region18: #{tpu_custom_call.1} parent=15 // pred_check_branch
          %163 = sbr.rel (%p161) target = $region20
        $region19: #{tpu_custom_call.1} parent=15 // pred_region
          %s164 = sand.u32 %s42, 1
          %s165 = scalar_lea.sflag [#allocation3], %s164
          %s166 = sand.u32 %s42, 1
          %s167 = smul.addr %s166, 8
          %s168 = scalar_lea.vmem [#allocation2], %s167
          %s169 = smul.u32 4, %s25
          %s171 = ssub.s32 128, 128
          %172 = vsyncadd %s165, %s171
          %s173 = sadd.s32 %s26, %s169
          %s174 = smul.addr %s173, 32
          %s175 = scalar_lea.hbm %s0, %s174
          %s176 = sshll.u32 %s168, 4
          %s177 = int_to_ptr.vmem [resolvable:$true] %s176
          %182 = dma.hbm_to_vmem [thread:$0]  %s175, 128, %s177, %s165, 32, 32, 2
        $region20: #{tpu_custom_call.1} parent=15 // pred_fallthru
          _
        // Predicated region
        $region21: #{tpu_custom_call.1} parent=15 // pred_check
          %p183 = pneg %p80
        $region22: #{tpu_custom_call.1} parent=15 // pred_check_branch
          %185 = sbr.rel (%p183) target = $region24
        $region23: #{tpu_custom_call.1} parent=15 // pred_region
          %s186 = sand.u32 %s70, 1
          %s187 = scalar_lea.sflag [#allocation6], %s186
          %s188 = sand.u32 %s70, 1
          %s189 = smul.addr %s188, 2
          %s190 = scalar_lea.vmem [#allocation5], %s189
          %s192 = ssub.s32 32, 32
          %193 = vsyncadd %s187, %s192
          %s194 = sadd.s32 %s26, %s25
          %s195 = smul.addr %s194, 32
          %s196 = scalar_lea.hbm %s1, %s195
          %s198 = sshll.u32 %s190, 4
          %s199 = int_to_ptr.vmem [resolvable:$true] %s198
          %201 = dma.hbm_to_vmem [thread:$0]  %s196, 32, %s199, %s187
        $region24: #{tpu_custom_call.1} parent=15 // pred_fallthru
          _
        // Predicated region
        $region25: #{tpu_custom_call.1} parent=15 // pred_check
          %p202 = pneg %p108
        $region26: #{tpu_custom_call.1} parent=15 // pred_check_branch
          %204 = sbr.rel (%p202) target = $region28
        $region27: #{tpu_custom_call.1} parent=15 // pred_region
          %p205 = scmp.lt.s32.totalorder %s25, 1
          %s206 = scalar_select %p205, %s25, 1
          %p207 = scmp.lt.s32.totalorder %s26, 0
          %s208 = scalar_select %p207, %s26, 0
          %s209 = sadd.s32 %s208, %s206
          %s210 = smul.addr %s209, 2
          %s211 = scalar_lea.vmem %s2, %s210
        $region28: #{tpu_custom_call.1} parent=15 // pred_fallthru
          _
      $region16: #{tpu_custom_call.1} parent=5 // pred_fallthru
        _
      %p212 = scmp.le.s32.totalorder 1, %s18
      %p213 = scmp.lt.s32.totalorder %s18, 3
      %p214 = pnand %p212, %p213
      %p215 = pneg %p214
      // Predicated region
      $region29: #{tpu_custom_call.1} parent=5 // pred_check
        _
      $region30: #{tpu_custom_call.1} parent=5 // pred_check_branch
        %217 = sbr.rel (%p214) target = $region32
      $region31: #{tpu_custom_call.1} parent=5 // pred_region
        %s218 = ssub.s32 %s18, 1
        %s219 = sand.u32 %s45, 1
        %s220 = scalar_lea.sflag [#allocation3], %s219
        %s221 = sand.u32 %s45, 1
        %s222 = smul.addr %s221, 8
        %s223 = scalar_lea.vmem [#allocation2], %s222
        // Predicated region
        $region33: #{tpu_custom_call.1} parent=31 // pred_check
          %p224 = pneg %p58
        $region34: #{tpu_custom_call.1} parent=31 // pred_check_branch
          %226 = sbr.rel (%p224) target = $region36
        $region35: #{tpu_custom_call.1} parent=31 // pred_region
          %227 = dma.done %s220, 128
        $region36: #{tpu_custom_call.1} parent=31 // pred_fallthru
          _
        %s228 = sand.u32 %s73, 1
        %s229 = scalar_lea.sflag [#allocation6], %s228
        %s230 = sand.u32 %s73, 1
        %s231 = smul.addr %s230, 2
        %s232 = scalar_lea.vmem [#allocation5], %s231
        // Predicated region
        $region37: #{tpu_custom_call.1} parent=31 // pred_check
          %p233 = pneg %p86
        $region38: #{tpu_custom_call.1} parent=31 // pred_check_branch
          %235 = sbr.rel (%p233) target = $region40
        $region39: #{tpu_custom_call.1} parent=31 // pred_region
          %236 = dma.done %s229, 32
        $region40: #{tpu_custom_call.1} parent=31 // pred_fallthru
          _
        %s237 = sand.u32 %s45, 1
        %s238 = scalar_lea.sflag [#allocation3], %s237
        %s239 = sand.u32 %s45, 1
        %s240 = smul.addr %s239, 8
        %s241 = scalar_lea.vmem [#allocation2], %s240
        %p242 = pneg %p58
        %p243 = pneg %p55
        %s244 = sand.u32 %s73, 1
        %s245 = scalar_lea.sflag [#allocation6], %s244
        %s246 = sand.u32 %s73, 1
        %s247 = smul.addr %s246, 2
        %s248 = scalar_lea.vmem [#allocation5], %s247
        %p249 = pneg %p86
        %p250 = pneg %p83
        %p251 = scmp.lt.s32.totalorder %s27, 1
        %s252 = scalar_select %p251, %s27, 1
        %p253 = scmp.lt.s32.totalorder %s28, 0
        %s254 = scalar_select %p253, %s28, 0
        %s255 = sadd.s32 %s254, %s252
        %s256 = smul.addr %s255, 2
        %s257 = scalar_lea.vmem %s2, %s256
        %p258 = pneg %p114
        %p259 = pneg %p111
        %p260 = pneg %p142
        %p261 = pneg %p139
        %s262 = sand.u32 %s129, 1
        %s263 = scalar_lea.sflag [#allocation4], %s262
        %s264 = sand.u32 %s129, 1
        %s265 = scalar_lea.vmem [#allocation7], %s264
        %s266 = smul.u32 4, %s27
        %p267 = scmp.lt.s32.totalorder %s27, 1
        %s268 = scalar_select %p267, %s27, 1
        %p269 = scmp.lt.s32.totalorder %s28, 0
        %s270 = scalar_select %p269, %s28, 0
        %s271 = sadd.s32 %s270, %s268
        %s272 = smul.addr %s271, 2
        %s273 = scalar_lea.vmem %s2, %s272
        %s274 = sadd.s32 %s27, %s28
        %v275 = vld [vmem:[%s223] sm:$0x3]
        %v276 = vld [vmem:[%s223 + $0x2] sm:$0x3]
        %v277 = vld [vmem:[%s223 + $0x4] sm:$0x3]
        %v278 = vld [vmem:[%s223 + $0x6] sm:$0x3]
        %v279 = vmax.f32 %v275, -50.0
        %v280 = vmax.f32 %v276, -50.0
        %v281 = vmax.f32 %v277, -50.0
        %v282 = vmax.f32 %v278, -50.0
        %v283 = vmin.f32 %v279, 50.0
        %v284 = vmin.f32 %v280, 50.0
        %v285 = vmin.f32 %v281, 50.0
        %v286 = vmin.f32 %v282, 50.0
        %vm287 = vcmask 1041408
        %v288 = vsel %vm287, %v283, -inf
        %v289 = vsel %vm287, %v284, -inf
        %v290 = vsel %vm287, %v285, -inf
        %v291 = vsel %vm287, %v286, -inf
        %v292 = vmax.f32 %v288, %v289
        %v293 = vmax.f32 %v290, %v291
        %v294 = vmax.f32 %v292, %v293
        %v295 = vsub.f32 %v283, %v294
        %v296 = vsub.f32 %v284, %v294
        %v297 = vsub.f32 %v285, %v294
        %v298 = vsub.f32 %v286, %v294
        %v299 = vmul.f32 %v295, 1.442695
        %v300 = vpow.pop %v299
        %v301 = vmul.f32 %v296, 1.442695
        %v302 = vpow.pop %v301
        %v303 = vmul.f32 %v297, 1.442695
        %v304 = vpow.pop %v303
        %v305 = vmul.f32 %v298, 1.442695
        %v306 = vpow.pop %v305
        %v307 = vsel %vm287, %v300, 0.0
        %v308 = vsel %vm287, %v302, 0.0
        %v309 = vadd.f32 %v307, %v308
        %v310 = vsel %vm287, %v304, 0.0
        %v311 = vadd.f32 %v309, %v310
        %v312 = vsel %vm287, %v306, 0.0
        %v313 = vadd.f32 %v311, %v312
        %v314 = vlog2.pop %v313
        %v315 = vmul.f32 %v314, 0.6931472
        %v316 = vld [vmem:[%s232] sm:$0x3]
        %vm317 = vcmp.gt.s32.totalorder %v316, 0
        %v318 = vsel %vm317, %v316, 0
        %vm319 = vcmp.lt.s32.totalorder %v318, 3
        %v320 = vsel %vm319, %v318, 3
        %vm321 = vcmp.eq.s32.totalorder %v320, 0
        %vm322 = vcmp.eq.s32.totalorder %v320, 1
        %vm323 = vcmp.eq.s32.totalorder %v320, 2
        %vm324 = vcmp.eq.s32.totalorder %v320, 3
        %v325 = vsel %vm321, 1, 0
        %v326 = vsel %vm322, 1, 0
        %v327 = vsel %vm323, 1, 0
        %v328 = vsel %vm324, 1, 0
        %v329 = vcvt.s32.f32 %v325
        %v330 = vcvt.s32.f32 %v326
        %v331 = vcvt.s32.f32 %v327
        %v332 = vcvt.s32.f32 %v328
        %v333 = vmul.f32 %v295, %v329
        %v334 = vmul.f32 %v296, %v330
        %v335 = vmul.f32 %v297, %v331
        %v336 = vmul.f32 %v298, %v332
        %v337 = vsel %vm287, %v333, 0.0
        %v338 = vsel %vm287, %v334, 0.0
        %v339 = vadd.f32 %v337, %v338
        %v340 = vsel %vm287, %v335, 0.0
        %v341 = vadd.f32 %v339, %v340
        %v342 = vsel %vm287, %v336, 0.0
        %v343 = vadd.f32 %v341, %v342
        %v344 = vsub.f32 %v343, %v315
        %v345 = vld [vmem:[%s273] sm:$0x3]
        %v346 = vsub.f32 0.0, %v345
        %v347 = vmul.f32 %v346, %v344
        %v348 = vsel %vm287, %v347, 0.0
        %v349 = vrot.slane %v348, 4
        %v350 = vadd.f32 %v348, %v349
        %v351 = vrot.slane %v350, 2
        %v352 = vadd.f32 %v350, %v351
        %v353 = vrot.slane %v352, 1
        %v354 = vadd.f32 %v352, %v353
        %355 = vst [vmem:[%s265] sm:$0x1] %v354
        %s356 = sand.u32 %s129, 1
        %s357 = scalar_lea.sflag [#allocation4], %s356
        %s358 = sand.u32 %s129, 1
        %s359 = scalar_lea.vmem [#allocation7], %s358
        // Predicated region
        $region41: #{tpu_custom_call.1} parent=31 // pred_check
          %p360 = pneg %p139
        $region42: #{tpu_custom_call.1} parent=31 // pred_check_branch
          %362 = sbr.rel (%p360) target = $region44
        $region43: #{tpu_custom_call.1} parent=31 // pred_region
          %s363 = sadd.s32 %s27, %s28
          %s365 = ssub.s32 16, 16
          %366 = vsyncadd %s357, %s365
          %s367 = smul.addr %s363, 16
          %s368 = scalar_lea.hbm %s3, %s367
          %s370 = sshll.u32 %s359, 4
          %s371 = int_to_ptr.vmem [resolvable:$true] %s370
          %373 = dma.vmem_to_hbm [thread:$0]  %s371, 16, %s368, %s357
        $region44: #{tpu_custom_call.1} parent=31 // pred_fallthru
          _
      $region32: #{tpu_custom_call.1} parent=5 // pred_fallthru
        _
      %p374 = scmp.le.s32.totalorder 2, %s18
      // Predicated region
      $region45: #{tpu_custom_call.1} parent=5 // pred_check
        %p375 = pneg %p374
      $region46: #{tpu_custom_call.1} parent=5 // pred_check_branch
        %377 = sbr.rel (%p375) target = $region48
      $region47: #{tpu_custom_call.1} parent=5 // pred_region
        %s378 = ssub.s32 %s18, 2
        // Predicated region
        $region49: #{tpu_custom_call.1} parent=47 // pred_check
          %p379 = pneg %p145
        $region50: #{tpu_custom_call.1} parent=47 // pred_check_branch
          %381 = sbr.rel (%p379) target = $region52
        $region51: #{tpu_custom_call.1} parent=47 // pred_region
          %s382 = sand.u32 %s130, 1
          %s383 = scalar_lea.sflag [#allocation4], %s382
          %s384 = sand.u32 %s130, 1
          %s385 = scalar_lea.vmem [#allocation7], %s384
          %386 = dma.done %s383, 16
        $region52: #{tpu_custom_call.1} parent=47 // pred_fallthru
          _
      $region48: #{tpu_custom_call.1} parent=5 // pred_fallthru
        _
    $region6: #{tpu_custom_call.1} parent=1 // loop_footer
      %s22 = sadd.s32 1, %s18
    $region7: #{tpu_custom_call.1} parent=1 // loop_footer_branch
      %17 = sbr.rel target = $region3
    $region8: #{tpu_custom_call.1} parent=1 // loop_exit
      _
    %387 = vsyncpa [#allocation3], 1
    %s388 = scalar_lea.sflag [#allocation3], 1
    %389 = vsyncpa %s388, 1
    %390 = vsyncpa [#allocation6], 1
    %s391 = scalar_lea.sflag [#allocation6], 1
    %392 = vsyncpa %s391, 1
    %393 = vsyncpa [#allocation4], 1
    %s394 = scalar_lea.sflag [#allocation4], 1
    %395 = vsyncpa %s394, 1

</llo_original>
